<compile_context>
chip_gen: v7x
topology: tpu7x:2x2x1
jax: 0.10.0
libtpu: 0.0.40
codegen_flags: <defaults>
</compile_context>

<pallas_src>
import functools

import jax
import jax.numpy as jnp
from jax.experimental import pallas as pl
from jax.experimental.pallas import tpu as pltpu


def _mish_fast(v):
    # mish(x) = x * tanh(softplus(x)).  With t = e^x (clamped so t^2 cannot overflow
    # in f32):  tanh(softplus(x)) = t*(t+2) / (t*(t+2) + 2).
    # For x > 30 the factor rounds to 1.0 in f32, matching the true value.
    t = jnp.exp(jnp.minimum(v, 30.0))
    u = t * (t + 2.0)
    return v * (u / (u + 2.0))


def _conv_mish_mish_kernel(x_ref, w_ref, b_ref, o_ref, patches_ref, *,
                           W, KH, KW, CIN, CIN_PAD, HW):
    # x_ref:       (Nblk, CIN, HW)
    # w_ref:       (Cout, KH*KW*CIN_PAD)   [row k = (i*KW + j)*CIN_PAD + c, zero-padded]
    # b_ref:       (Cout, 1)
    # o_ref:       (Nblk, Cout, HW)
    # patches_ref: (KH*KW*CIN_PAD, Nblk*HW) f32 VMEM scratch
    n_img = x_ref.shape[0]

    # Zero once so the padded sublane rows (CIN..CIN_PAD-1 of every tap group) are
    # exact zeros; their matching weight columns are zero as well.
    patches_ref[...] = jnp.zeros_like(patches_ref)

    # im2col via lane rolls: tap (i, j) of image n is x rolled left by d = i*W + j,
    # stored at the aligned (8*g, n*HW) corner of the scratch (sublane offset is a
    # multiple of 8, lane offset a multiple of 128).  Wrap-around garbage lands only
    # at spatial positions with row >= Ho or col >= Wo, which the VALID crop discards.
    for n in range(n_img):                              # static; n_img is 1 or 2
        xn = x_ref[n]                                   # (CIN, HW)
        for i in range(KH):
            for j in range(KW):
                g = i * KW + j
                d = i * W + j
                shifted = xn if d == 0 else jnp.roll(xn, -d, axis=-1)
                patches_ref[pl.ds(g * CIN_PAD, CIN), pl.ds(n * HW, HW)] = shifted

    # Single fused MXU contraction with f32 accumulation: (Cout, K) @ (K, Nblk*HW).
    acc = jnp.dot(w_ref[...], patches_ref[...], preferred_element_type=jnp.float32)
    acc = acc + b_ref[...]                              # (Cout, 1) broadcasts over lanes

    y = _mish_fast(_mish_fast(acc))                     # double Mish, lane-dense

    for n in range(n_img):                              # lane offsets are multiples of 128
        o_ref[n] = y[:, n * HW:(n + 1) * HW].astype(o_ref.dtype)


def prepare_conv_params(weight_oihw, bias, cin_pad=8):
    """One-time (init-time) reorder: OIHW -> (Cout, KH*KW*cin_pad) and (Cout, 1) bias.

    Kept OUT of the jitted per-call path so it does not cost a dispatch per call.
    """
    Cout, Cin, KH, KW = weight_oihw.shape
    w = jnp.transpose(weight_oihw, (0, 2, 3, 1))                   # (Cout, KH, KW, Cin)
    w = jnp.pad(w, ((0, 0), (0, 0), (0, 0), (0, cin_pad - Cin)))   # zero-pad channels
    w_k = w.reshape(Cout, KH * KW * cin_pad).astype(jnp.float32)
    b_col = bias.reshape(Cout, 1).astype(jnp.float32)
    return w_k, b_col


def _default_grid_blocks(batch):
    """2 parallel lane blocks on dual-TensorCore chips (v7x); 1 step elsewhere."""
    try:
        kind = jax.devices()[0].device_kind.lower()
    except Exception:
        return 1
    return 2 if (("v7" in kind or "7x" in kind) and batch % 2 == 0) else 1


@functools.partial(jax.jit, static_argnames=("kh", "kw", "cin_pad", "grid_blocks"))
def conv2d_mish_mish(x_nchw, w_k, b_col, *, kh, kw, cin_pad=8, grid_blocks=1):
    """x_nchw: (N, Cin, H, W) f32; w_k/b_col from prepare_conv_params."""
    N, Cin, H, W = x_nchw.shape
    Cout, Kp = w_k.shape
    Ho, Wo = H - kh + 1, W - kw + 1
    HW = H * W

    # The roll-based im2col is ONLY valid for stride-1, padding=0 (VALID) convolution:
    # wrap contamination falls entirely in rows >= Ho / cols >= Wo, which the final
    # crop removes.  SAME padding / stride > 1 would silently break it.
    assert Kp == kh * kw * cin_pad and Cin <= cin_pad
    assert Ho >= 1 and Wo >= 1
    assert x_nchw.dtype == jnp.float32            # exp clamp at 30.0 is only f32-safe
    assert N % grid_blocks == 0
    n_blk = N // grid_blocks

    x_flat = x_nchw.reshape(N, Cin, HW)           # trailing-dim merge -> free

    cost = pl.CostEstimate(
        flops=2 * Cout * Kp * N * HW + 16 * Cout * N * HW,
        transcendentals=2 * Cout * N * HW,
        bytes_accessed=(N * Cin * HW + Cout * Kp + Cout + N * Cout * HW) * 4,
    )

    out_flat = pl.pallas_call(
        functools.partial(_conv_mish_mish_kernel, W=W, KH=kh, KW=kw,
                          CIN=Cin, CIN_PAD=cin_pad, HW=HW),
        out_shape=jax.ShapeDtypeStruct((N, Cout, HW), x_nchw.dtype),
        grid_spec=pltpu.PrefetchScalarGridSpec(
            num_scalar_prefetch=0,
            grid=(grid_blocks,),
            in_specs=[
                pl.BlockSpec((n_blk, Cin, HW), lambda b: (b, 0, 0)),
                pl.BlockSpec((Cout, Kp), lambda b: (0, 0)),
                pl.BlockSpec((Cout, 1), lambda b: (0, 0)),
            ],
            out_specs=pl.BlockSpec((n_blk, Cout, HW), lambda b: (b, 0, 0)),
            scratch_shapes=[pltpu.VMEM((Kp, n_blk * HW), jnp.float32)],
        ),
        compiler_params=pltpu.CompilerParams(dimension_semantics=("parallel",)),
        cost_estimate=cost,
    )(x_flat, w_k, b_col)

    # Output is already NCHW-flat at full (H, W) spatial size.  The VALID crop below is
    # one wrapper-side HLO slice, kept only to preserve the module's output shape
    # (a downstream consumer could fuse or skip it).
    return out_flat.reshape(N, Cout, H, W)[:, :, :Ho, :Wo]


# ----------------------------- pure-JAX reference ------------------------------------
def _mish_ref(v):
    sp = jnp.maximum(v, 0.0) + jnp.log1p(jnp.exp(-jnp.abs(v)))
    return v * jnp.tanh(sp)


def _reference(x_nchw, weight_oihw, bias):
    y = jax.lax.conv_general_dilated(
        x_nchw, weight_oihw, window_strides=(1, 1), padding="VALID",
        dimension_numbers=("NCHW", "OIHW", "NCHW"))
    y = y + bias[None, :, None, None]
    return _mish_ref(_mish_ref(y))


if __name__ == "__main__":
    in_channels, out_channels, kernel_size = 3, 16, 3
    batch, H, W = 2, 16, 16

    key = jax.random.PRNGKey(0)
    kx, kw_key, kb = jax.random.split(key, 3)

    x = jax.random.normal(kx, (batch, in_channels, H, W), dtype=jnp.float32)

    # Deterministic Conv2d-style init: U(-1/sqrt(fan_in), 1/sqrt(fan_in))
    fan_in = in_channels * kernel_size * kernel_size
    bound = 1.0 / (fan_in ** 0.5)
    weight = jax.random.uniform(
        kw_key, (out_channels, in_channels, kernel_size, kernel_size),
        minval=-bound, maxval=bound, dtype=jnp.float32)
    bias = jax.random.uniform(
        kb, (out_channels,), minval=-bound, maxval=bound, dtype=jnp.float32)

    # One-time parameter prep, outside the jitted per-call path.
    w_k, b_col = prepare_conv_params(weight, bias, cin_pad=8)
    grid_blocks = _default_grid_blocks(batch)

    out = jax.block_until_ready(conv2d_mish_mish(
        x, w_k, b_col, kh=kernel_size, kw=kernel_size, cin_pad=8,
        grid_blocks=grid_blocks))
    ref = jax.block_until_ready(_reference(x, weight, bias))

    assert out.shape == (batch, out_channels, H - kernel_size + 1, W - kernel_size + 1)
    assert jnp.allclose(out, ref, atol=1e-5, rtol=1e-5)

    print("KERNEL_OK")
</pallas_src>

<mosaic_0001>
module attributes {stable_mosaic.version = 11 : i64} {
  func.func @_conv_mish_mish_kernel(%arg0: i32, %arg1: memref<2x3x256xf32, #tpu.memory_space<vmem>>, %arg2: memref<16x72xf32, #tpu.memory_space<vmem>>, %arg3: memref<16x1xf32, #tpu.memory_space<vmem>>, %arg4: memref<2x16x256xf32, #tpu.memory_space<vmem>>, %arg5: memref<72x512xf32, #tpu.memory_space<vmem>>) attributes {dimension_semantics = [#tpu.dimension_semantics<parallel>], iteration_bounds = array<i64: 1>, scalar_prefetch = 0 : i64, scratch_operands = 1 : i64, tpu.core_type = #tpu.core_type<tc>, window_params = [{transform_indices = @transform_0, window_bounds = array<i64: 2, 3, 256>}, {pipeline_mode = #tpu.pipeline_mode<synchronous>, transform_indices = @transform_1, window_bounds = array<i64: 16, 72>}, {pipeline_mode = #tpu.pipeline_mode<synchronous>, transform_indices = @transform_2, window_bounds = array<i64: 16, 1>}, {transform_indices = @transform_3, window_bounds = array<i64: 2, 16, 256>}]} {
    %cst = arith.constant 0.000000e+00 : f32
    %0 = vector.broadcast %cst : f32 to vector<72x512xf32>
    %c0 = arith.constant 0 : index
    %c0_0 = arith.constant 0 : index
    %1 = vector.load %arg5[%c0, %c0_0] : memref<72x512xf32, #tpu.memory_space<vmem>>, vector<72x512xf32>
    tpu.vector_store %arg5[%c0, %c0_0], %0 {strides = array<i32>} : memref<72x512xf32, #tpu.memory_space<vmem>>, vector<72x512xf32>,
    %c0_1 = arith.constant 0 : index
    %c0_2 = arith.constant 0 : index
    %c0_3 = arith.constant 0 : index
    %2 = vector.load %arg1[%c0_1, %c0_2, %c0_3] : memref<2x3x256xf32, #tpu.memory_space<vmem>>, vector<1x3x256xf32>
    %3 = vector.shape_cast %2 : vector<1x3x256xf32> to vector<3x256xf32>
    %c0_4 = arith.constant 0 : index
    %c0_5 = arith.constant 0 : index
    %4 = vector.load %arg5[%c0_4, %c0_5] : memref<72x512xf32, #tpu.memory_space<vmem>>, vector<3x256xf32>
    tpu.vector_store %arg5[%c0_4, %c0_5], %3 {strides = array<i32>} : memref<72x512xf32, #tpu.memory_space<vmem>>, vector<3x256xf32>,
    %5 = vector.extract_strided_slice %3 {offsets = [0, 1], sizes = [3, 255], strides = [1, 1]} : vector<3x256xf32> to vector<3x255xf32>
    %6 = vector.extract_strided_slice %3 {offsets = [0, 0], sizes = [3, 1], strides = [1, 1]} : vector<3x256xf32> to vector<3x1xf32>
    %7 = tpu.concatenate %5, %6 in 1 : vector<3x255xf32>, vector<3x1xf32> -> vector<3x256xf32>
    %c8 = arith.constant 8 : index
    %c0_6 = arith.constant 0 : index
    %8 = vector.load %arg5[%c8, %c0_6] : memref<72x512xf32, #tpu.memory_space<vmem>>, vector<3x256xf32>
    tpu.vector_store %arg5[%c8, %c0_6], %7 {strides = array<i32>} : memref<72x512xf32, #tpu.memory_space<vmem>>, vector<3x256xf32>,
    %9 = vector.extract_strided_slice %3 {offsets = [0, 2], sizes = [3, 254], strides = [1, 1]} : vector<3x256xf32> to vector<3x254xf32>
    %10 = vector.extract_strided_slice %3 {offsets = [0, 0], sizes = [3, 2], strides = [1, 1]} : vector<3x256xf32> to vector<3x2xf32>
    %11 = tpu.concatenate %9, %10 in 1 : vector<3x254xf32>, vector<3x2xf32> -> vector<3x256xf32>
    %c16 = arith.constant 16 : index
    %c0_7 = arith.constant 0 : index
    %12 = vector.load %arg5[%c16, %c0_7] : memref<72x512xf32, #tpu.memory_space<vmem>>, vector<3x256xf32>
    tpu.vector_store %arg5[%c16, %c0_7], %11 {strides = array<i32>} : memref<72x512xf32, #tpu.memory_space<vmem>>, vector<3x256xf32>,
    %13 = vector.extract_strided_slice %3 {offsets = [0, 16], sizes = [3, 240], strides = [1, 1]} : vector<3x256xf32> to vector<3x240xf32>
    %14 = vector.extract_strided_slice %3 {offsets = [0, 0], sizes = [3, 16], strides = [1, 1]} : vector<3x256xf32> to vector<3x16xf32>
    %15 = tpu.concatenate %13, %14 in 1 : vector<3x240xf32>, vector<3x16xf32> -> vector<3x256xf32>
    %c24 = arith.constant 24 : index
    %c0_8 = arith.constant 0 : index
    %16 = vector.load %arg5[%c24, %c0_8] : memref<72x512xf32, #tpu.memory_space<vmem>>, vector<3x256xf32>
    tpu.vector_store %arg5[%c24, %c0_8], %15 {strides = array<i32>} : memref<72x512xf32, #tpu.memory_space<vmem>>, vector<3x256xf32>,
    %17 = vector.extract_strided_slice %3 {offsets = [0, 17], sizes = [3, 239], strides = [1, 1]} : vector<3x256xf32> to vector<3x239xf32>
    %18 = vector.extract_strided_slice %3 {offsets = [0, 0], sizes = [3, 17], strides = [1, 1]} : vector<3x256xf32> to vector<3x17xf32>
    %19 = tpu.concatenate %17, %18 in 1 : vector<3x239xf32>, vector<3x17xf32> -> vector<3x256xf32>
    %c32 = arith.constant 32 : index
    %c0_9 = arith.constant 0 : index
    %20 = vector.load %arg5[%c32, %c0_9] : memref<72x512xf32, #tpu.memory_space<vmem>>, vector<3x256xf32>
    tpu.vector_store %arg5[%c32, %c0_9], %19 {strides = array<i32>} : memref<72x512xf32, #tpu.memory_space<vmem>>, vector<3x256xf32>,
    %21 = vector.extract_strided_slice %3 {offsets = [0, 18], sizes = [3, 238], strides = [1, 1]} : vector<3x256xf32> to vector<3x238xf32>
    %22 = vector.extract_strided_slice %3 {offsets = [0, 0], sizes = [3, 18], strides = [1, 1]} : vector<3x256xf32> to vector<3x18xf32>
    %23 = tpu.concatenate %21, %22 in 1 : vector<3x238xf32>, vector<3x18xf32> -> vector<3x256xf32>
    %c40 = arith.constant 40 : index
    %c0_10 = arith.constant 0 : index
    %24 = vector.load %arg5[%c40, %c0_10] : memref<72x512xf32, #tpu.memory_space<vmem>>, vector<3x256xf32>
    tpu.vector_store %arg5[%c40, %c0_10], %23 {strides = array<i32>} : memref<72x512xf32, #tpu.memory_space<vmem>>, vector<3x256xf32>,
    %25 = vector.extract_strided_slice %3 {offsets = [0, 32], sizes = [3, 224], strides = [1, 1]} : vector<3x256xf32> to vector<3x224xf32>
    %26 = vector.extract_strided_slice %3 {offsets = [0, 0], sizes = [3, 32], strides = [1, 1]} : vector<3x256xf32> to vector<3x32xf32>
    %27 = tpu.concatenate %25, %26 in 1 : vector<3x224xf32>, vector<3x32xf32> -> vector<3x256xf32>
    %c48 = arith.constant 48 : index
    %c0_11 = arith.constant 0 : index
    %28 = vector.load %arg5[%c48, %c0_11] : memref<72x512xf32, #tpu.memory_space<vmem>>, vector<3x256xf32>
    tpu.vector_store %arg5[%c48, %c0_11], %27 {strides = array<i32>} : memref<72x512xf32, #tpu.memory_space<vmem>>, vector<3x256xf32>,
    %29 = vector.extract_strided_slice %3 {offsets = [0, 33], sizes = [3, 223], strides = [1, 1]} : vector<3x256xf32> to vector<3x223xf32>
    %30 = vector.extract_strided_slice %3 {offsets = [0, 0], sizes = [3, 33], strides = [1, 1]} : vector<3x256xf32> to vector<3x33xf32>
    %31 = tpu.concatenate %29, %30 in 1 : vector<3x223xf32>, vector<3x33xf32> -> vector<3x256xf32>
    %c56 = arith.constant 56 : index
    %c0_12 = arith.constant 0 : index
    %32 = vector.load %arg5[%c56, %c0_12] : memref<72x512xf32, #tpu.memory_space<vmem>>, vector<3x256xf32>
    tpu.vector_store %arg5[%c56, %c0_12], %31 {strides = array<i32>} : memref<72x512xf32, #tpu.memory_space<vmem>>, vector<3x256xf32>,
    %33 = vector.extract_strided_slice %3 {offsets = [0, 34], sizes = [3, 222], strides = [1, 1]} : vector<3x256xf32> to vector<3x222xf32>
    %34 = vector.extract_strided_slice %3 {offsets = [0, 0], sizes = [3, 34], strides = [1, 1]} : vector<3x256xf32> to vector<3x34xf32>
    %35 = tpu.concatenate %33, %34 in 1 : vector<3x222xf32>, vector<3x34xf32> -> vector<3x256xf32>
    %c64 = arith.constant 64 : index
    %c0_13 = arith.constant 0 : index
    %36 = vector.load %arg5[%c64, %c0_13] : memref<72x512xf32, #tpu.memory_space<vmem>>, vector<3x256xf32>
    tpu.vector_store %arg5[%c64, %c0_13], %35 {strides = array<i32>} : memref<72x512xf32, #tpu.memory_space<vmem>>, vector<3x256xf32>,
    %c1 = arith.constant 1 : index
    %c0_14 = arith.constant 0 : index
    %c0_15 = arith.constant 0 : index
    %37 = vector.load %arg1[%c1, %c0_14, %c0_15] : memref<2x3x256xf32, #tpu.memory_space<vmem>>, vector<1x3x256xf32>
    %38 = vector.shape_cast %37 : vector<1x3x256xf32> to vector<3x256xf32>
    %c0_16 = arith.constant 0 : index
    %c256 = arith.constant 256 : index
    %39 = vector.load %arg5[%c0_16, %c256] : memref<72x512xf32, #tpu.memory_space<vmem>>, vector<3x256xf32>
    tpu.vector_store %arg5[%c0_16, %c256], %38 {strides = array<i32>} : memref<72x512xf32, #tpu.memory_space<vmem>>, vector<3x256xf32>,
    %40 = vector.extract_strided_slice %38 {offsets = [0, 1], sizes = [3, 255], strides = [1, 1]} : vector<3x256xf32> to vector<3x255xf32>
    %41 = vector.extract_strided_slice %38 {offsets = [0, 0], sizes = [3, 1], strides = [1, 1]} : vector<3x256xf32> to vector<3x1xf32>
    %42 = tpu.concatenate %40, %41 in 1 : vector<3x255xf32>, vector<3x1xf32> -> vector<3x256xf32>
    %c8_17 = arith.constant 8 : index
    %c256_18 = arith.constant 256 : index
    %43 = vector.load %arg5[%c8_17, %c256_18] : memref<72x512xf32, #tpu.memory_space<vmem>>, vector<3x256xf32>
    tpu.vector_store %arg5[%c8_17, %c256_18], %42 {strides = array<i32>} : memref<72x512xf32, #tpu.memory_space<vmem>>, vector<3x256xf32>,
    %44 = vector.extract_strided_slice %38 {offsets = [0, 2], sizes = [3, 254], strides = [1, 1]} : vector<3x256xf32> to vector<3x254xf32>
    %45 = vector.extract_strided_slice %38 {offsets = [0, 0], sizes = [3, 2], strides = [1, 1]} : vector<3x256xf32> to vector<3x2xf32>
    %46 = tpu.concatenate %44, %45 in 1 : vector<3x254xf32>, vector<3x2xf32> -> vector<3x256xf32>
    %c16_19 = arith.constant 16 : index
    %c256_20 = arith.constant 256 : index
    %47 = vector.load %arg5[%c16_19, %c256_20] : memref<72x512xf32, #tpu.memory_space<vmem>>, vector<3x256xf32>
    tpu.vector_store %arg5[%c16_19, %c256_20], %46 {strides = array<i32>} : memref<72x512xf32, #tpu.memory_space<vmem>>, vector<3x256xf32>,
    %48 = vector.extract_strided_slice %38 {offsets = [0, 16], sizes = [3, 240], strides = [1, 1]} : vector<3x256xf32> to vector<3x240xf32>
    %49 = vector.extract_strided_slice %38 {offsets = [0, 0], sizes = [3, 16], strides = [1, 1]} : vector<3x256xf32> to vector<3x16xf32>
    %50 = tpu.concatenate %48, %49 in 1 : vector<3x240xf32>, vector<3x16xf32> -> vector<3x256xf32>
    %c24_21 = arith.constant 24 : index
    %c256_22 = arith.constant 256 : index
    %51 = vector.load %arg5[%c24_21, %c256_22] : memref<72x512xf32, #tpu.memory_space<vmem>>, vector<3x256xf32>
    tpu.vector_store %arg5[%c24_21, %c256_22], %50 {strides = array<i32>} : memref<72x512xf32, #tpu.memory_space<vmem>>, vector<3x256xf32>,
    %52 = vector.extract_strided_slice %38 {offsets = [0, 17], sizes = [3, 239], strides = [1, 1]} : vector<3x256xf32> to vector<3x239xf32>
    %53 = vector.extract_strided_slice %38 {offsets = [0, 0], sizes = [3, 17], strides = [1, 1]} : vector<3x256xf32> to vector<3x17xf32>
    %54 = tpu.concatenate %52, %53 in 1 : vector<3x239xf32>, vector<3x17xf32> -> vector<3x256xf32>
    %c32_23 = arith.constant 32 : index
    %c256_24 = arith.constant 256 : index
    %55 = vector.load %arg5[%c32_23, %c256_24] : memref<72x512xf32, #tpu.memory_space<vmem>>, vector<3x256xf32>
    tpu.vector_store %arg5[%c32_23, %c256_24], %54 {strides = array<i32>} : memref<72x512xf32, #tpu.memory_space<vmem>>, vector<3x256xf32>,
    %56 = vector.extract_strided_slice %38 {offsets = [0, 18], sizes = [3, 238], strides = [1, 1]} : vector<3x256xf32> to vector<3x238xf32>
    %57 = vector.extract_strided_slice %38 {offsets = [0, 0], sizes = [3, 18], strides = [1, 1]} : vector<3x256xf32> to vector<3x18xf32>
    %58 = tpu.concatenate %56, %57 in 1 : vector<3x238xf32>, vector<3x18xf32> -> vector<3x256xf32>
    %c40_25 = arith.constant 40 : index
    %c256_26 = arith.constant 256 : index
    %59 = vector.load %arg5[%c40_25, %c256_26] : memref<72x512xf32, #tpu.memory_space<vmem>>, vector<3x256xf32>
    tpu.vector_store %arg5[%c40_25, %c256_26], %58 {strides = array<i32>} : memref<72x512xf32, #tpu.memory_space<vmem>>, vector<3x256xf32>,
    %60 = vector.extract_strided_slice %38 {offsets = [0, 32], sizes = [3, 224], strides = [1, 1]} : vector<3x256xf32> to vector<3x224xf32>
    %61 = vector.extract_strided_slice %38 {offsets = [0, 0], sizes = [3, 32], strides = [1, 1]} : vector<3x256xf32> to vector<3x32xf32>
    %62 = tpu.concatenate %60, %61 in 1 : vector<3x224xf32>, vector<3x32xf32> -> vector<3x256xf32>
    %c48_27 = arith.constant 48 : index
    %c256_28 = arith.constant 256 : index
    %63 = vector.load %arg5[%c48_27, %c256_28] : memref<72x512xf32, #tpu.memory_space<vmem>>, vector<3x256xf32>
    tpu.vector_store %arg5[%c48_27, %c256_28], %62 {strides = array<i32>} : memref<72x512xf32, #tpu.memory_space<vmem>>, vector<3x256xf32>,
    %64 = vector.extract_strided_slice %38 {offsets = [0, 33], sizes = [3, 223], strides = [1, 1]} : vector<3x256xf32> to vector<3x223xf32>
    %65 = vector.extract_strided_slice %38 {offsets = [0, 0], sizes = [3, 33], strides = [1, 1]} : vector<3x256xf32> to vector<3x33xf32>
    %66 = tpu.concatenate %64, %65 in 1 : vector<3x223xf32>, vector<3x33xf32> -> vector<3x256xf32>
    %c56_29 = arith.constant 56 : index
    %c256_30 = arith.constant 256 : index
    %67 = vector.load %arg5[%c56_29, %c256_30] : memref<72x512xf32, #tpu.memory_space<vmem>>, vector<3x256xf32>
    tpu.vector_store %arg5[%c56_29, %c256_30], %66 {strides = array<i32>} : memref<72x512xf32, #tpu.memory_space<vmem>>, vector<3x256xf32>,
    %68 = vector.extract_strided_slice %38 {offsets = [0, 34], sizes = [3, 222], strides = [1, 1]} : vector<3x256xf32> to vector<3x222xf32>
    %69 = vector.extract_strided_slice %38 {offsets = [0, 0], sizes = [3, 34], strides = [1, 1]} : vector<3x256xf32> to vector<3x34xf32>
    %70 = tpu.concatenate %68, %69 in 1 : vector<3x222xf32>, vector<3x34xf32> -> vector<3x256xf32>
    %c64_31 = arith.constant 64 : index
    %c256_32 = arith.constant 256 : index
    %71 = vector.load %arg5[%c64_31, %c256_32] : memref<72x512xf32, #tpu.memory_space<vmem>>, vector<3x256xf32>
    tpu.vector_store %arg5[%c64_31, %c256_32], %70 {strides = array<i32>} : memref<72x512xf32, #tpu.memory_space<vmem>>, vector<3x256xf32>,
    %c0_33 = arith.constant 0 : index
    %c0_34 = arith.constant 0 : index
    %72 = vector.load %arg2[%c0_33, %c0_34] : memref<16x72xf32, #tpu.memory_space<vmem>>, vector<16x72xf32>
    %c0_35 = arith.constant 0 : index
    %c0_36 = arith.constant 0 : index
    %73 = vector.load %arg5[%c0_35, %c0_36] : memref<72x512xf32, #tpu.memory_space<vmem>>, vector<72x512xf32>
    %cst_37 = arith.constant dense<0.000000e+00> : vector<16x512xf32>
    %74 = tpu.matmul %72, %73, %cst_37 {dimension_numbers = #tpu.dot_dimension_numbers<[1], [0], [0], [1], [0, 0, 1, 1], [], []>} : vector<16x72xf32>, vector<72x512xf32>, vector<16x512xf32> -> vector<16x512xf32>
    %c0_38 = arith.constant 0 : index
    %c0_39 = arith.constant 0 : index
    %75 = vector.load %arg3[%c0_38, %c0_39] : memref<16x1xf32, #tpu.memory_space<vmem>>, vector<16x1xf32>
    %76 = vector.broadcast %75 : vector<16x1xf32> to vector<16x512xf32>
    %77 = arith.addf %74, %76 : vector<16x512xf32>
    %cst_40 = arith.constant 3.000000e+01 : f32
    %78 = vector.broadcast %cst_40 : f32 to vector<16x512xf32>
    %79 = arith.minimumf %77, %78 : vector<16x512xf32>
    %80 = math.exp %79 : vector<16x512xf32>
    %cst_41 = arith.constant 2.000000e+00 : f32
    %81 = vector.broadcast %cst_41 : f32 to vector<16x512xf32>
    %82 = arith.addf %80, %81 : vector<16x512xf32>
    %83 = arith.mulf %80, %82 : vector<16x512xf32>
    %cst_42 = arith.constant 2.000000e+00 : f32
    %84 = vector.broadcast %cst_42 : f32 to vector<16x512xf32>
    %85 = arith.addf %83, %84 : vector<16x512xf32>
    %86 = arith.divf %83, %85 : vector<16x512xf32>
    %87 = arith.mulf %77, %86 : vector<16x512xf32>
    %cst_43 = arith.constant 3.000000e+01 : f32
    %88 = vector.broadcast %cst_43 : f32 to vector<16x512xf32>
    %89 = arith.minimumf %87, %88 : vector<16x512xf32>
    %90 = math.exp %89 : vector<16x512xf32>
    %cst_44 = arith.constant 2.000000e+00 : f32
    %91 = vector.broadcast %cst_44 : f32 to vector<16x512xf32>
    %92 = arith.addf %90, %91 : vector<16x512xf32>
    %93 = arith.mulf %90, %92 : vector<16x512xf32>
    %cst_45 = arith.constant 2.000000e+00 : f32
    %94 = vector.broadcast %cst_45 : f32 to vector<16x512xf32>
    %95 = arith.addf %93, %94 : vector<16x512xf32>
    %96 = arith.divf %93, %95 : vector<16x512xf32>
    %97 = arith.mulf %87, %96 : vector<16x512xf32>
    %98 = vector.extract_strided_slice %97 {offsets = [0, 0], sizes = [16, 256], strides = [1, 1]} : vector<16x512xf32> to vector<16x256xf32>
    %c0_46 = arith.constant 0 : index
    %c0_47 = arith.constant 0 : index
    %c0_48 = arith.constant 0 : index
    %99 = vector.load %arg4[%c0_46, %c0_47, %c0_48] : memref<2x16x256xf32, #tpu.memory_space<vmem>>, vector<1x16x256xf32>
    %100 = vector.shape_cast %99 : vector<1x16x256xf32> to vector<16x256xf32>
    %101 = vector.shape_cast %98 : vector<16x256xf32> to vector<1x16x256xf32>
    tpu.vector_store %arg4[%c0_46, %c0_47, %c0_48], %101 {strides = array<i32>} : memref<2x16x256xf32, #tpu.memory_space<vmem>>, vector<1x16x256xf32>,
    %102 = vector.extract_strided_slice %97 {offsets = [0, 256], sizes = [16, 256], strides = [1, 1]} : vector<16x512xf32> to vector<16x256xf32>
    %c1_49 = arith.constant 1 : index
    %c0_50 = arith.constant 0 : index
    %c0_51 = arith.constant 0 : index
    %103 = vector.load %arg4[%c1_49, %c0_50, %c0_51] : memref<2x16x256xf32, #tpu.memory_space<vmem>>, vector<1x16x256xf32>
    %104 = vector.shape_cast %103 : vector<1x16x256xf32> to vector<16x256xf32>
    %105 = vector.shape_cast %102 : vector<16x256xf32> to vector<1x16x256xf32>
    tpu.vector_store %arg4[%c1_49, %c0_50, %c0_51], %105 {strides = array<i32>} : memref<2x16x256xf32, #tpu.memory_space<vmem>>, vector<1x16x256xf32>,
    return
  }
  func.func @transform_0(%arg0: i32) -> (i32, i32, i32) {
    %c0_i32 = arith.constant 0 : i32
    %c0_i32_0 = arith.constant 0 : i32
    %c0_i32_1 = arith.constant 0 : i32
    return %arg0, %c0_i32, %c0_i32_0 : i32, i32, i32
  }
  func.func @transform_1(%arg0: i32) -> (i32, i32) {
    %c0_i32 = arith.constant 0 : i32
    %c0_i32_0 = arith.constant 0 : i32
    %c0_i32_1 = arith.constant 0 : i32
    return %c0_i32, %c0_i32_0 : i32, i32
  }
  func.func @transform_2(%arg0: i32) -> (i32, i32) {
    %c0_i32 = arith.constant 0 : i32
    %c0_i32_0 = arith.constant 0 : i32
    %c0_i32_1 = arith.constant 0 : i32
    return %c0_i32, %c0_i32_0 : i32, i32
  }
  func.func @transform_3(%arg0: i32) -> (i32, i32, i32) {
    %c0_i32 = arith.constant 0 : i32
    %c0_i32_0 = arith.constant 0 : i32
    %c0_i32_1 = arith.constant 0 : i32
    return %arg0, %c0_i32, %c0_i32_0 : i32, i32, i32
  }
}

</mosaic_0001>

<llo_original>
// kernel: conv2d_mish_mish.1
$region0: #{conv2d_mish_mish.1}
  #allocation0 [shape = 'u32[]', space=smem, size = 0x4, offset = 0x4, fixed_abs, tag = 'smem constant byte address 0x4 - core index']
  #allocation1 [shape = 'u32[144,128]{1,0:T(1,128)}', space=vmem, size = 0x12000, scoped, tag = 'internal scratch']
  #allocation2 [shape = 'f32[72,512]{1,0:T(8,128)}', space=vmem, size = 0x24000, scoped, tag = 'scratch operand']
  %s0 = inlined_call_operand.vmem [shape: f32[2,3,256], index: 0, kind: input, shape index: {}]
  %s1 = inlined_call_operand.vmem [shape: f32[16,72], index: 1, kind: input, shape index: {}]
  %s2 = inlined_call_operand.vmem [shape: f32[16,1], index: 2, kind: input, shape index: {}]
  %s3 = inlined_call_operand.vmem [shape: f32[2,16,256], index: 3, kind: output, shape index: {}]
  %s4 = sld [smem:[#allocation0]]
  $region22: #{conv2d_mish_mish.1} parent=0
    _
  %s6 = ssub.s32 1, %s4
  %s7 = scalar_select 0, %s6, %s4
  // Predicated region
  $region2: #{conv2d_mish_mish.1} parent=0 // pred_check
    _
  $region3: #{conv2d_mish_mish.1} parent=0 // pred_check_branch
    %9 = sbr.rel (0) target = $region5
  $region4: #{conv2d_mish_mish.1} parent=0 // pred_region
    _
  $region5: #{conv2d_mish_mish.1} parent=0 // pred_fallthru
    _
  // Predicated region
  $region6: #{conv2d_mish_mish.1} parent=0 // pred_check
    _
  $region7: #{conv2d_mish_mish.1} parent=0 // pred_check_branch
    %11 = sbr.rel (0) target = $region9
  $region8: #{conv2d_mish_mish.1} parent=0 // pred_region
    _
  $region9: #{conv2d_mish_mish.1} parent=0 // pred_fallthru
    _
  // Predicated region
  $region10: #{conv2d_mish_mish.1} parent=0 // pred_check
    _
  $region11: #{conv2d_mish_mish.1} parent=0 // pred_check_branch
    %13 = sbr.rel (0) target = $region13
  $region12: #{conv2d_mish_mish.1} parent=0 // pred_region
    _
  $region13: #{conv2d_mish_mish.1} parent=0 // pred_fallthru
    _
  %14 = vst [vmem:[#allocation2] sm:$0xff] 0.0
  %15 = vst [vmem:[#allocation2 + $0x8] sm:$0xff] 0.0
  %16 = vst [vmem:[#allocation2 + $0x10] sm:$0xff] 0.0
  %17 = vst [vmem:[#allocation2 + $0x18] sm:$0xff] 0.0
  %18 = vst [vmem:[#allocation2 + $0x20] sm:$0xff] 0.0
  %19 = vst [vmem:[#allocation2 + $0x28] sm:$0xff] 0.0
  %20 = vst [vmem:[#allocation2 + $0x30] sm:$0xff] 0.0
  %21 = vst [vmem:[#allocation2 + $0x38] sm:$0xff] 0.0
  %22 = vst [vmem:[#allocation2 + $0x40] sm:$0xff] 0.0
  %23 = vst [vmem:[#allocation2 + $0x48] sm:$0xff] 0.0
  %24 = vst [vmem:[#allocation2 + $0x50] sm:$0xff] 0.0
  %25 = vst [vmem:[#allocation2 + $0x58] sm:$0xff] 0.0
  %26 = vst [vmem:[#allocation2 + $0x60] sm:$0xff] 0.0
  %27 = vst [vmem:[#allocation2 + $0x68] sm:$0xff] 0.0
  %28 = vst [vmem:[#allocation2 + $0x70] sm:$0xff] 0.0
  %29 = vst [vmem:[#allocation2 + $0x78] sm:$0xff] 0.0
  %30 = vst [vmem:[#allocation2 + $0x80] sm:$0xff] 0.0
  %31 = vst [vmem:[#allocation2 + $0x88] sm:$0xff] 0.0
  %32 = vst [vmem:[#allocation2 + $0x90] sm:$0xff] 0.0
  %33 = vst [vmem:[#allocation2 + $0x98] sm:$0xff] 0.0
  %34 = vst [vmem:[#allocation2 + $0xa0] sm:$0xff] 0.0
  %35 = vst [vmem:[#allocation2 + $0xa8] sm:$0xff] 0.0
  %36 = vst [vmem:[#allocation2 + $0xb0] sm:$0xff] 0.0
  %37 = vst [vmem:[#allocation2 + $0xb8] sm:$0xff] 0.0
  %38 = vst [vmem:[#allocation2 + $0xc0] sm:$0xff] 0.0
  %39 = vst [vmem:[#allocation2 + $0xc8] sm:$0xff] 0.0
  %40 = vst [vmem:[#allocation2 + $0xd0] sm:$0xff] 0.0
  %41 = vst [vmem:[#allocation2 + $0xd8] sm:$0xff] 0.0
  %42 = vst [vmem:[#allocation2 + $0xe0] sm:$0xff] 0.0
  %43 = vst [vmem:[#allocation2 + $0xe8] sm:$0xff] 0.0
  %44 = vst [vmem:[#allocation2 + $0xf0] sm:$0xff] 0.0
  %45 = vst [vmem:[#allocation2 + $0xf8] sm:$0xff] 0.0
  %46 = vst [vmem:[#allocation2 + $0x100] sm:$0xff] 0.0
  %47 = vst [vmem:[#allocation2 + $0x108] sm:$0xff] 0.0
  %48 = vst [vmem:[#allocation2 + $0x110] sm:$0xff] 0.0
  %49 = vst [vmem:[#allocation2 + $0x118] sm:$0xff] 0.0
  %v50 = vld [vmem:[%s0] sm:$0x77]
  %v52 = vcombine.high %v50, %v50
  %54 = vst [vmem:[#allocation2] sm:$0x7] %v50
  %55 = vst [vmem:[#allocation2 + $0x8] sm:$0x7] %v52
  %56 = vrot.lane.b32.xlu0 %v50, 127
  %v57 = vpop.permute.xlu0 %56
  %58 = vrot.lane.b32.xlu0 %v52, 127
  %v59 = vpop.permute.xlu0 %58
  %vm60 = vcmask 1039360
  %v61 = vsel %vm60, %v57, %v59
  %v65 = vsel %vm60, %v59, %v57
  %66 = vst [vmem:[#allocation2 + $0x20] sm:$0x7] %v61
  %67 = vst [vmem:[#allocation2 + $0x28] sm:$0x7] %v65
  %68 = vrot.lane.b32.xlu0 %v50, 126
  %v69 = vpop.permute.xlu0 %68
  %70 = vrot.lane.b32.xlu0 %v52, 126
  %v71 = vpop.permute.xlu0 %70
  %vm72 = vcmask 1031168
  %v73 = vsel %vm72, %v69, %v71
  %v77 = vsel %vm72, %v71, %v69
  %78 = vst [vmem:[#allocation2 + $0x40] sm:$0x7] %v73
  %79 = vst [vmem:[#allocation2 + $0x48] sm:$0x7] %v77
  %80 = vrot.lane.b32.xlu0 %v50, 112
  %v81 = vpop.permute.xlu0 %80
  %82 = vrot.lane.b32.xlu0 %v52, 112
  %v83 = vpop.permute.xlu0 %82
  %vm84 = vcmask 916480
  %v85 = vsel %vm84, %v81, %v83
  %v89 = vsel %vm84, %v83, %v81
  %90 = vst [vmem:[#allocation2 + $0x60] sm:$0x7] %v85
  %91 = vst [vmem:[#allocation2 + $0x68] sm:$0x7] %v89
  %92 = vrot.lane.b32.xlu0 %v50, 111
  %v93 = vpop.permute.xlu0 %92
  %94 = vrot.lane.b32.xlu0 %v52, 111
  %v95 = vpop.permute.xlu0 %94
  %vm96 = vcmask 908288
  %v97 = vsel %vm96, %v93, %v95
  %v101 = vsel %vm96, %v95, %v93
  %102 = vst [vmem:[#allocation2 + $0x80] sm:$0x7] %v97
  %103 = vst [vmem:[#allocation2 + $0x88] sm:$0x7] %v101
  %104 = vrot.lane.b32.xlu0 %v50, 110
  %v105 = vpop.permute.xlu0 %104
  %106 = vrot.lane.b32.xlu0 %v52, 110
  %v107 = vpop.permute.xlu0 %106
  %vm108 = vcmask 900096
  %v109 = vsel %vm108, %v105, %v107
  %v113 = vsel %vm108, %v107, %v105
  %114 = vst [vmem:[#allocation2 + $0xa0] sm:$0x7] %v109
  %115 = vst [vmem:[#allocation2 + $0xa8] sm:$0x7] %v113
  %116 = vrot.lane.b32.xlu0 %v50, 96
  %v117 = vpop.permute.xlu0 %116
  %118 = vrot.lane.b32.xlu0 %v52, 96
  %v119 = vpop.permute.xlu0 %118
  %vm120 = vcmask 785408
  %v121 = vsel %vm120, %v117, %v119
  %v125 = vsel %vm120, %v119, %v117
  %126 = vst [vmem:[#allocation2 + $0xc0] sm:$0x7] %v121
  %127 = vst [vmem:[#allocation2 + $0xc8] sm:$0x7] %v125
  %128 = vrot.lane.b32.xlu0 %v50, 95
  %v129 = vpop.permute.xlu0 %128
  %130 = vrot.lane.b32.xlu0 %v52, 95
  %v131 = vpop.permute.xlu0 %130
  %vm132 = vcmask 777216
  %v133 = vsel %vm132, %v129, %v131
  %v137 = vsel %vm132, %v131, %v129
  %138 = vst [vmem:[#allocation2 + $0xe0] sm:$0x7] %v133
  %139 = vst [vmem:[#allocation2 + $0xe8] sm:$0x7] %v137
  %140 = vrot.lane.b32.xlu0 %v50, 94
  %v141 = vpop.permute.xlu0 %140
  %142 = vrot.lane.b32.xlu0 %v52, 94
  %v143 = vpop.permute.xlu0 %142
  %vm144 = vcmask 769024
  %v145 = vsel %vm144, %v141, %v143
  %v149 = vsel %vm144, %v143, %v141
  %150 = vst [vmem:[#allocation2 + $0x100] sm:$0x7] %v145
  %151 = vst [vmem:[#allocation2 + $0x108] sm:$0x7] %v149
  %s152 = scalar_lea.vmem %s0, 8
  %v153 = vld [vmem:[%s152] sm:$0x77]
  %v155 = vcombine.high %v153, %v153
  %157 = vst [vmem:[#allocation2 + $0x10] sm:$0x7] %v153
  %158 = vst [vmem:[#allocation2 + $0x18] sm:$0x7] %v155
  %159 = vrot.lane.b32.xlu0 %v153, 127
  %v160 = vpop.permute.xlu0 %159
  %161 = vrot.lane.b32.xlu0 %v155, 127
  %v162 = vpop.permute.xlu0 %161
  %v163 = vsel %vm60, %v160, %v162
  %v167 = vsel %vm60, %v162, %v160
  %168 = vst [vmem:[#allocation2 + $0x30] sm:$0x7] %v163
  %169 = vst [vmem:[#allocation2 + $0x38] sm:$0x7] %v167
  %170 = vrot.lane.b32.xlu0 %v153, 126
  %v171 = vpop.permute.xlu0 %170
  %172 = vrot.lane.b32.xlu0 %v155, 126
  %v173 = vpop.permute.xlu0 %172
  %v174 = vsel %vm72, %v171, %v173
  %v178 = vsel %vm72, %v173, %v171
  %179 = vst [vmem:[#allocation2 + $0x50] sm:$0x7] %v174
  %180 = vst [vmem:[#allocation2 + $0x58] sm:$0x7] %v178
  %181 = vrot.lane.b32.xlu0 %v153, 112
  %v182 = vpop.permute.xlu0 %181
  %183 = vrot.lane.b32.xlu0 %v155, 112
  %v184 = vpop.permute.xlu0 %183
  %v185 = vsel %vm84, %v182, %v184
  %v189 = vsel %vm84, %v184, %v182
  %190 = vst [vmem:[#allocation2 + $0x70] sm:$0x7] %v185
  %191 = vst [vmem:[#allocation2 + $0x78] sm:$0x7] %v189
  %192 = vrot.lane.b32.xlu0 %v153, 111
  %v193 = vpop.permute.xlu0 %192
  %194 = vrot.lane.b32.xlu0 %v155, 111
  %v195 = vpop.permute.xlu0 %194
  %v196 = vsel %vm96, %v193, %v195
  %v200 = vsel %vm96, %v195, %v193
  %201 = vst [vmem:[#allocation2 + $0x90] sm:$0x7] %v196
  %202 = vst [vmem:[#allocation2 + $0x98] sm:$0x7] %v200
  %203 = vrot.lane.b32.xlu0 %v153, 110
  %v204 = vpop.permute.xlu0 %203
  %205 = vrot.lane.b32.xlu0 %v155, 110
  %v206 = vpop.permute.xlu0 %205
  %v207 = vsel %vm108, %v204, %v206
  %v211 = vsel %vm108, %v206, %v204
  %212 = vst [vmem:[#allocation2 + $0xb0] sm:$0x7] %v207
  %213 = vst [vmem:[#allocation2 + $0xb8] sm:$0x7] %v211
  %214 = vrot.lane.b32.xlu0 %v153, 96
  %v215 = vpop.permute.xlu0 %214
  %216 = vrot.lane.b32.xlu0 %v155, 96
  %v217 = vpop.permute.xlu0 %216
  %v218 = vsel %vm120, %v215, %v217
  %v222 = vsel %vm120, %v217, %v215
  %223 = vst [vmem:[#allocation2 + $0xd0] sm:$0x7] %v218
  %224 = vst [vmem:[#allocation2 + $0xd8] sm:$0x7] %v222
  %225 = vrot.lane.b32.xlu0 %v153, 95
  %v226 = vpop.permute.xlu0 %225
  %227 = vrot.lane.b32.xlu0 %v155, 95
  %v228 = vpop.permute.xlu0 %227
  %v229 = vsel %vm132, %v226, %v228
  %v233 = vsel %vm132, %v228, %v226
  %234 = vst [vmem:[#allocation2 + $0xf0] sm:$0x7] %v229
  %235 = vst [vmem:[#allocation2 + $0xf8] sm:$0x7] %v233
  %236 = vrot.lane.b32.xlu0 %v153, 94
  %v237 = vpop.permute.xlu0 %236
  %238 = vrot.lane.b32.xlu0 %v155, 94
  %v239 = vpop.permute.xlu0 %238
  %v240 = vsel %vm144, %v237, %v239
  %v244 = vsel %vm144, %v239, %v237
  %245 = vst [vmem:[#allocation2 + $0x110] sm:$0x7] %v240
  %246 = vst [vmem:[#allocation2 + $0x118] sm:$0x7] %v244
  %v247 = vld [vmem:[%s1] sm:$0xff]
  %v248 = vld [vmem:[%s1 + $0x8] sm:$0xff]
  %v249 = vld [vmem:[#allocation2] sm:$0xff]
  %v250 = vld [vmem:[#allocation2 + $0x8] sm:$0xff]
  %v251 = vld [vmem:[#allocation2 + $0x10] sm:$0xff]
  %v252 = vld [vmem:[#allocation2 + $0x18] sm:$0xff]
  %v253 = vld [vmem:[#allocation2 + $0x20] sm:$0xff]
  %v254 = vld [vmem:[#allocation2 + $0x28] sm:$0xff]
  %v255 = vld [vmem:[#allocation2 + $0x30] sm:$0xff]
  %v256 = vld [vmem:[#allocation2 + $0x38] sm:$0xff]
  %v257 = vld [vmem:[#allocation2 + $0x40] sm:$0xff]
  %v258 = vld [vmem:[#allocation2 + $0x48] sm:$0xff]
  %v259 = vld [vmem:[#allocation2 + $0x50] sm:$0xff]
  %v260 = vld [vmem:[#allocation2 + $0x58] sm:$0xff]
  %v261 = vld [vmem:[#allocation2 + $0x60] sm:$0xff]
  %v262 = vld [vmem:[#allocation2 + $0x68] sm:$0xff]
  %v263 = vld [vmem:[#allocation2 + $0x70] sm:$0xff]
  %v264 = vld [vmem:[#allocation2 + $0x78] sm:$0xff]
  %v265 = vld [vmem:[#allocation2 + $0x80] sm:$0xff]
  %v266 = vld [vmem:[#allocation2 + $0x88] sm:$0xff]
  %v267 = vld [vmem:[#allocation2 + $0x90] sm:$0xff]
  %v268 = vld [vmem:[#allocation2 + $0x98] sm:$0xff]
  %v269 = vld [vmem:[#allocation2 + $0xa0] sm:$0xff]
  %v270 = vld [vmem:[#allocation2 + $0xa8] sm:$0xff]
  %v271 = vld [vmem:[#allocation2 + $0xb0] sm:$0xff]
  %v272 = vld [vmem:[#allocation2 + $0xb8] sm:$0xff]
  %v273 = vld [vmem:[#allocation2 + $0xc0] sm:$0xff]
  %v274 = vld [vmem:[#allocation2 + $0xc8] sm:$0xff]
  %v275 = vld [vmem:[#allocation2 + $0xd0] sm:$0xff]
  %v276 = vld [vmem:[#allocation2 + $0xd8] sm:$0xff]
  %v277 = vld [vmem:[#allocation2 + $0xe0] sm:$0xff]
  %v278 = vld [vmem:[#allocation2 + $0xe8] sm:$0xff]
  %v279 = vld [vmem:[#allocation2 + $0xf0] sm:$0xff]
  %v280 = vld [vmem:[#allocation2 + $0xf8] sm:$0xff]
  %v281 = vld [vmem:[#allocation2 + $0x100] sm:$0xff]
  %v282 = vld [vmem:[#allocation2 + $0x108] sm:$0xff]
  %v283 = vld [vmem:[#allocation2 + $0x110] sm:$0xff]
  %v284 = vld [vmem:[#allocation2 + $0x118] sm:$0xff]
  %v285 = vld [vmem:[%s2] sm:$0xff]
  %v286 = vld [vmem:[%s2 + $0x8] sm:$0xff]
  %288 = vset.pattern.permute.xlu0 0
  %289 = vperm.xlu0 %288, %v285
  %v290 = vpop.permute.xlu0 %289
  %293 = vset.pattern.permute.xlu0 0
  %294 = vperm.xlu0 %293, %v286
  %v295 = vpop.permute.xlu0 %294
  %vm297 = vcmask 588800
  %v299 = vsel %vm297, %v247, 0
  %v302 = vsel %vm297, %v248, 0
  %304 = vmatprep.subr.mxu0 %v250
  %305 = vmatpush1.msra.mxu0 %v249
  %306 = vmatprep.subr.mxu0 %v254
  %307 = vmatpush1.msra.mxu0 %v253
  %308 = vmatprep.subr.mxu0 %v258
  %309 = vmatpush1.msra.mxu0 %v257
  %310 = vmatprep.subr.mxu0 %v262
  %311 = vmatpush1.msra.mxu0 %v261
  %312 = vmatprep.subr.mxu0 %v266
  %313 = vmatpush1.msra.mxu0 %v265
  %314 = vmatprep.subr.mxu0 %v270
  %315 = vmatpush1.msra.mxu0 %v269
  %316 = vmatprep.subr.mxu0 %v274
  %317 = vmatpush1.msra.mxu0 %v273
  %318 = vmatprep.subr.mxu0 %v278
  %319 = vmatpush1.msra.mxu0 %v277
  %320 = vmatprep.subr.mxu0 %v282
  %321 = vmatpush1.msra.mxu0 %v281
  %322 = vmatprep.subr.mxu0 0.0
  %323 = vmatpush1.msra.mxu0 0.0
  %324 = vmatprep.subr.mxu0 0.0
  %325 = vmatpush1.msra.mxu0 0.0
  %326 = vmatprep.subr.mxu0 0.0
  %327 = vmatpush1.msra.mxu0 0.0
  %328 = vmatprep.subr.mxu0 0.0
  %329 = vmatpush1.msra.mxu0 0.0
  %330 = vmatprep.subr.mxu0 0.0
  %331 = vmatpush1.msra.mxu0 0.0
  %332 = vmatprep.subr.mxu0 0.0
  %333 = vmatpush1.msra.mxu0 0.0
  %334 = vmatprep.subr.mxu0 0.0
  %335 = vmatpush1.msra.mxu0 0.0
  %336 = vmatprep.subr.mxu0 0.0
  %337 = vmatpush1.msra.mxu0 0.0
  %338 = vmatprep.subr.mxu0 0.0
  %339 = vmatpush1.msra.mxu0 0.0
  %340 = vmatprep.subr.mxu0 0.0
  %341 = vmatpush1.msra.mxu0 0.0
  %342 = vmatprep.subr.mxu0 0.0
  %343 = vmatpush1.msra.mxu0 0.0
  %344 = vmatprep.subr.mxu0 0.0
  %345 = vmatpush1.msra.mxu0 0.0
  %346 = vmatprep.subr.mxu0 0.0
  %347 = vmatpush1.msra.mxu0 0.0
  %348 = vmatprep.subr.mxu0 0.0
  %349 = vmatpush1.msra.mxu0 0.0
  %350 = vmatprep.subr.mxu0 0.0
  %351 = vmatpush1.msra.mxu0 0.0
  %352 = vmatprep.subr.mxu0 0.0
  %353 = vmatpush1.msra.mxu0 0.0
  %354 = vmatprep.subr.mxu0 0.0
  %355 = vmatpush1.msra.mxu0 0.0
  %356 = vmatprep.subr.mxu0 0.0
  %357 = vmatpush1.msra.mxu0 0.0
  %358 = vmatprep.subr.mxu0 0.0
  %359 = vmatpush1.msra.mxu0 0.0
  %360 = vmatprep.subr.mxu0 0.0
  %361 = vmatpush1.msra.mxu0 0.0
  %362 = vmatprep.subr.mxu0 0.0
  %363 = vmatpush1.msra.mxu0 0.0
  %364 = vmatprep.subr.mxu0 0.0
  %365 = vmatpush1.msra.mxu0 0.0
  %366 = vmatprep.subr.mxu0 0.0
  %367 = vmatpush1.msra.mxu0 0.0
  %368 = vmatprep.mubr.f32.mxu0 0.0
  %369 = vmatmul.mubr.f32.gmra.mrb[0].mxu0 %v299
  %v370 = vpop.f32.mrb[0].mxu0
  %v371 = vadd.f32 %v290, %v370
  %v372 = vpop.f32.mrb[0].mxu0
  %v373 = vadd.f32 %v290, %v372
  %374 = vmatprep.mubr.f32.mxu0 0.0
  %375 = vmatmul.mubr.f32.gmra.mrb[0].mxu0 %v302
  %v376 = vpop.f32.mrb[0].mxu0
  %v377 = vadd.f32 %v295, %v376
  %v378 = vpop.f32.mrb[0].mxu0
  %v379 = vadd.f32 %v295, %v378
  %380 = vdwg.mxu0
  %381 = vmatprep.subr.mxu0 %v252
  %382 = vmatpush1.msra.mxu0 %v251
  %383 = vmatprep.subr.mxu0 %v256
  %384 = vmatpush1.msra.mxu0 %v255
  %385 = vmatprep.subr.mxu0 %v260
  %386 = vmatpush1.msra.mxu0 %v259
  %387 = vmatprep.subr.mxu0 %v264
  %388 = vmatpush1.msra.mxu0 %v263
  %389 = vmatprep.subr.mxu0 %v268
  %390 = vmatpush1.msra.mxu0 %v267
  %391 = vmatprep.subr.mxu0 %v272
  %392 = vmatpush1.msra.mxu0 %v271
  %393 = vmatprep.subr.mxu0 %v276
  %394 = vmatpush1.msra.mxu0 %v275
  %395 = vmatprep.subr.mxu0 %v280
  %396 = vmatpush1.msra.mxu0 %v279
  %397 = vmatprep.subr.mxu0 %v284
  %398 = vmatpush1.msra.mxu0 %v283
  %399 = vmatprep.subr.mxu0 0.0
  %400 = vmatpush1.msra.mxu0 0.0
  %401 = vmatprep.subr.mxu0 0.0
  %402 = vmatpush1.msra.mxu0 0.0
  %403 = vmatprep.subr.mxu0 0.0
  %404 = vmatpush1.msra.mxu0 0.0
  %405 = vmatprep.subr.mxu0 0.0
  %406 = vmatpush1.msra.mxu0 0.0
  %407 = vmatprep.subr.mxu0 0.0
  %408 = vmatpush1.msra.mxu0 0.0
  %409 = vmatprep.subr.mxu0 0.0
  %410 = vmatpush1.msra.mxu0 0.0
  %411 = vmatprep.subr.mxu0 0.0
  %412 = vmatpush1.msra.mxu0 0.0
  %413 = vmatprep.subr.mxu0 0.0
  %414 = vmatpush1.msra.mxu0 0.0
  %415 = vmatprep.subr.mxu0 0.0
  %416 = vmatpush1.msra.mxu0 0.0
  %417 = vmatprep.subr.mxu0 0.0
  %418 = vmatpush1.msra.mxu0 0.0
  %419 = vmatprep.subr.mxu0 0.0
  %420 = vmatpush1.msra.mxu0 0.0
  %421 = vmatprep.subr.mxu0 0.0
  %422 = vmatpush1.msra.mxu0 0.0
  %423 = vmatprep.subr.mxu0 0.0
  %424 = vmatpush1.msra.mxu0 0.0
  %425 = vmatprep.subr.mxu0 0.0
  %426 = vmatpush1.msra.mxu0 0.0
  %427 = vmatprep.subr.mxu0 0.0
  %428 = vmatpush1.msra.mxu0 0.0
  %429 = vmatprep.subr.mxu0 0.0
  %430 = vmatpush1.msra.mxu0 0.0
  %431 = vmatprep.subr.mxu0 0.0
  %432 = vmatpush1.msra.mxu0 0.0
  %433 = vmatprep.subr.mxu0 0.0
  %434 = vmatpush1.msra.mxu0 0.0
  %435 = vmatprep.subr.mxu0 0.0
  %436 = vmatpush1.msra.mxu0 0.0
  %437 = vmatprep.subr.mxu0 0.0
  %438 = vmatpush1.msra.mxu0 0.0
  %439 = vmatprep.subr.mxu0 0.0
  %440 = vmatpush1.msra.mxu0 0.0
  %441 = vmatprep.subr.mxu0 0.0
  %442 = vmatpush1.msra.mxu0 0.0
  %443 = vmatprep.subr.mxu0 0.0
  %444 = vmatpush1.msra.mxu0 0.0
  %445 = vmatprep.mubr.f32.mxu0 0.0
  %446 = vmatmul.mubr.f32.gmra.mrb[0].mxu0 %v299
  %v447 = vpop.f32.mrb[0].mxu0
  %v448 = vadd.f32 %v290, %v447
  %v449 = vpop.f32.mrb[0].mxu0
  %v450 = vadd.f32 %v290, %v449
  %451 = vmatprep.mubr.f32.mxu0 0.0
  %452 = vmatmul.mubr.f32.gmra.mrb[0].mxu0 %v302
  %v453 = vpop.f32.mrb[0].mxu0
  %v454 = vadd.f32 %v295, %v453
  %v455 = vpop.f32.mrb[0].mxu0
  %v456 = vadd.f32 %v295, %v455
  %457 = vdwg.mxu0
  %v458 = vmin.f32 %v371, 30.0
  %v459 = vmin.f32 %v373, 30.0
  %v460 = vmin.f32 %v448, 30.0
  %v461 = vmin.f32 %v450, 30.0
  %v462 = vmin.f32 %v377, 30.0
  %v463 = vmin.f32 %v379, 30.0
  %v464 = vmin.f32 %v454, 30.0
  %v465 = vmin.f32 %v456, 30.0
  %v466 = vmul.f32 %v458, 1.442695
  %v467 = vpow.pop %v466
  %v468 = vmul.f32 %v459, 1.442695
  %v469 = vpow.pop %v468
  %v470 = vmul.f32 %v460, 1.442695
  %v471 = vpow.pop %v470
  %v472 = vmul.f32 %v461, 1.442695
  %v473 = vpow.pop %v472
  %v474 = vmul.f32 %v462, 1.442695
  %v475 = vpow.pop %v474
  %v476 = vmul.f32 %v463, 1.442695
  %v477 = vpow.pop %v476
  %v478 = vmul.f32 %v464, 1.442695
  %v479 = vpow.pop %v478
  %v480 = vmul.f32 %v465, 1.442695
  %v481 = vpow.pop %v480
  %v482 = vadd.f32 %v467, 2.0
  %v483 = vadd.f32 %v469, 2.0
  %v484 = vadd.f32 %v471, 2.0
  %v485 = vadd.f32 %v473, 2.0
  %v486 = vadd.f32 %v475, 2.0
  %v487 = vadd.f32 %v477, 2.0
  %v488 = vadd.f32 %v479, 2.0
  %v489 = vadd.f32 %v481, 2.0
  %v490 = vmul.f32 %v467, %v482
  %v491 = vmul.f32 %v469, %v483
  %v492 = vmul.f32 %v471, %v484
  %v493 = vmul.f32 %v473, %v485
  %v494 = vmul.f32 %v475, %v486
  %v495 = vmul.f32 %v477, %v487
  %v496 = vmul.f32 %v479, %v488
  %v497 = vmul.f32 %v481, %v489
  %v498 = vadd.f32 %v490, 2.0
  %v499 = vadd.f32 %v491, 2.0
  %v500 = vadd.f32 %v492, 2.0
  %v501 = vadd.f32 %v493, 2.0
  %v502 = vadd.f32 %v494, 2.0
  %v503 = vadd.f32 %v495, 2.0
  %v504 = vadd.f32 %v496, 2.0
  %v505 = vadd.f32 %v497, 2.0
  %v506 = vrcp.pop %v498
  %v507 = vmul.f32 %v490, %v506
  %v508 = vrcp.pop %v499
  %v509 = vmul.f32 %v491, %v508
  %v510 = vrcp.pop %v500
  %v511 = vmul.f32 %v492, %v510
  %v512 = vrcp.pop %v501
  %v513 = vmul.f32 %v493, %v512
  %v514 = vrcp.pop %v502
  %v515 = vmul.f32 %v494, %v514
  %v516 = vrcp.pop %v503
  %v517 = vmul.f32 %v495, %v516
  %v518 = vrcp.pop %v504
  %v519 = vmul.f32 %v496, %v518
  %v520 = vrcp.pop %v505
  %v521 = vmul.f32 %v497, %v520
  %v522 = vmul.f32 %v371, %v507
  %v523 = vmul.f32 %v373, %v509
  %v524 = vmul.f32 %v448, %v511
  %v525 = vmul.f32 %v450, %v513
  %v526 = vmul.f32 %v377, %v515
  %v527 = vmul.f32 %v379, %v517
  %v528 = vmul.f32 %v454, %v519
  %v529 = vmul.f32 %v456, %v521
  %v530 = vmin.f32 %v522, 30.0
  %v531 = vmin.f32 %v523, 30.0
  %v532 = vmin.f32 %v524, 30.0
  %v533 = vmin.f32 %v525, 30.0
  %v534 = vmin.f32 %v526, 30.0
  %v535 = vmin.f32 %v527, 30.0
  %v536 = vmin.f32 %v528, 30.0
  %v537 = vmin.f32 %v529, 30.0
  %v538 = vmul.f32 %v530, 1.442695
  %v539 = vpow.pop %v538
  %v540 = vmul.f32 %v531, 1.442695
  %v541 = vpow.pop %v540
  %v542 = vmul.f32 %v532, 1.442695
  %v543 = vpow.pop %v542
  %v544 = vmul.f32 %v533, 1.442695
  %v545 = vpow.pop %v544
  %v546 = vmul.f32 %v534, 1.442695
  %v547 = vpow.pop %v546
  %v548 = vmul.f32 %v535, 1.442695
  %v549 = vpow.pop %v548
  %v550 = vmul.f32 %v536, 1.442695
  %v551 = vpow.pop %v550
  %v552 = vmul.f32 %v537, 1.442695
  %v553 = vpow.pop %v552
  %v554 = vadd.f32 %v539, 2.0
  %v555 = vadd.f32 %v541, 2.0
  %v556 = vadd.f32 %v543, 2.0
  %v557 = vadd.f32 %v545, 2.0
  %v558 = vadd.f32 %v547, 2.0
  %v559 = vadd.f32 %v549, 2.0
  %v560 = vadd.f32 %v551, 2.0
  %v561 = vadd.f32 %v553, 2.0
  %v562 = vmul.f32 %v539, %v554
  %v563 = vmul.f32 %v541, %v555
  %v564 = vmul.f32 %v543, %v556
  %v565 = vmul.f32 %v545, %v557
  %v566 = vmul.f32 %v547, %v558
  %v567 = vmul.f32 %v549, %v559
  %v568 = vmul.f32 %v551, %v560
  %v569 = vmul.f32 %v553, %v561
  %v570 = vadd.f32 %v562, 2.0
  %v571 = vadd.f32 %v563, 2.0
  %v572 = vadd.f32 %v564, 2.0
  %v573 = vadd.f32 %v565, 2.0
  %v574 = vadd.f32 %v566, 2.0
  %v575 = vadd.f32 %v567, 2.0
  %v576 = vadd.f32 %v568, 2.0
  %v577 = vadd.f32 %v569, 2.0
  %v578 = vrcp.pop %v570
  %v579 = vmul.f32 %v562, %v578
  %v580 = vrcp.pop %v571
  %v581 = vmul.f32 %v563, %v580
  %v582 = vrcp.pop %v572
  %v583 = vmul.f32 %v564, %v582
  %v584 = vrcp.pop %v573
  %v585 = vmul.f32 %v565, %v584
  %v586 = vrcp.pop %v574
  %v587 = vmul.f32 %v566, %v586
  %v588 = vrcp.pop %v575
  %v589 = vmul.f32 %v567, %v588
  %v590 = vrcp.pop %v576
  %v591 = vmul.f32 %v568, %v590
  %v592 = vrcp.pop %v577
  %v593 = vmul.f32 %v569, %v592
  %v594 = vmul.f32 %v522, %v579
  %v595 = vmul.f32 %v523, %v581
  %v596 = vmul.f32 %v524, %v583
  %v597 = vmul.f32 %v525, %v585
  %v598 = vmul.f32 %v526, %v587
  %v599 = vmul.f32 %v527, %v589
  %v600 = vmul.f32 %v528, %v591
  %v601 = vmul.f32 %v529, %v593
  %602 = vst [vmem:[%s3] sm:$0xff] %v594
  %603 = vst [vmem:[%s3 + $0x8] sm:$0xff] %v595
  %604 = vst [vmem:[%s3 + $0x10] sm:$0xff] %v598
  %605 = vst [vmem:[%s3 + $0x18] sm:$0xff] %v599
  %s606 = scalar_lea.vmem %s3, 32
  %607 = vst [vmem:[%s606] sm:$0xff] %v596
  %608 = vst [vmem:[%s606 + $0x8] sm:$0xff] %v597
  %609 = vst [vmem:[%s606 + $0x10] sm:$0xff] %v600
  %610 = vst [vmem:[%s606 + $0x18] sm:$0xff] %v601
  // Predicated region
  $region14: #{conv2d_mish_mish.1} parent=0 // pred_check
    _
  $region15: #{conv2d_mish_mish.1} parent=0 // pred_check_branch
    %612 = sbr.rel (0) target = $region17
  $region16: #{conv2d_mish_mish.1} parent=0 // pred_region
    _
  $region17: #{conv2d_mish_mish.1} parent=0 // pred_fallthru
    _
  // Predicated region
  $region18: #{conv2d_mish_mish.1} parent=0 // pred_check
    _
  $region19: #{conv2d_mish_mish.1} parent=0 // pred_check_branch
    %614 = sbr.rel (0) target = $region21
  $region20: #{conv2d_mish_mish.1} parent=0 // pred_region
    _
  $region21: #{conv2d_mish_mish.1} parent=0 // pred_fallthru
    _

</llo_original>
